<compile_context>
chip_gen: v7x
topology: tpu7x:2x2x1
jax: 0.10.0
libtpu: 0.0.40
codegen_flags: <defaults>
</compile_context>

<pallas_src>
import jax
import jax.numpy as jnp
from jax.experimental import pallas as pl
from jax.experimental.pallas import tpu as pltpu


def _round_up(x: int, m: int) -> int:
    return ((x + m - 1) // m) * m


def _make_simlp_kernel(nb_layers: int):
    """Build a kernel closure for a fixed number of Linear layers."""

    def kernel(*refs):
        # refs = (x_ref, w0, b0, w1, b1, ..., w{L-1}, b{L-1}, out_ref)
        x_ref = refs[0]
        o_ref = refs[-1]
        params = refs[1:-1]

        h = x_ref[...]                       # (tb, in_dim) bf16
        for layer in range(nb_layers):
            w = params[2 * layer][...]       # (fan_in, fan_out) bf16
            b = params[2 * layer + 1][...]   # (1, fan_out) f32
            # bf16 x bf16 -> f32 accumulation on the MXU; bias add in f32.
            h = jnp.dot(h, w, preferred_element_type=jnp.float32) + b
            if layer < nb_layers - 1:        # ReLU on all but the last layer
                # ReLU in f32 (v5e has no bf16 VPU), cast back to bf16 for the
                # next MXU pass.
                h = jnp.maximum(h, 0.0).astype(jnp.bfloat16)

        # Numerically stable softmax over the last dim, all in f32.
        m = jnp.max(h, axis=-1, keepdims=True)
        e = jnp.exp(h - m)
        s = jnp.sum(e, axis=-1, keepdims=True)
        # Divide moved off the VALU onto the EUP.
        o_ref[...] = (e * pl.reciprocal(s, approx=True)).astype(o_ref.dtype)

    return kernel


_VMEM_LIMIT_BYTES = 32 * 1024 * 1024   # safe on v5e/v6e (128 MiB) and v7x (64 MiB)
_VMEM_TILE_BUDGET = 20 * 1024 * 1024   # keep actual usage well under the limit


def _choose_block_batch(B, in_dim, hid_dim, out_dim, weights_bytes, target=512):
    """Largest batch tile (multiple of 16) that fits the VMEM budget."""
    widest = max(in_dim, hid_dim, out_dim)
    # Per-row footprint: double-buffered bf16 x, double-buffered f32 out,
    # plus ~3 live f32 working activations of the widest layer.
    per_row = 2 * (in_dim * 2) + 2 * (out_dim * 4) + 3 * (widest * 4)
    budget = max(_VMEM_TILE_BUDGET - weights_bytes, 16 * per_row)
    bb = min(target, budget // per_row)
    # Keep at least 2 grid steps when the batch allows it, so the "parallel"
    # batch axis can shard across v7x's two TensorCores.
    if B >= 32:
        bb = min(bb, _round_up((B + 1) // 2, 16))
    bb = min(bb, _round_up(B, 16))
    bb = max(16, (bb // 16) * 16)
    return int(bb)


def simlp_forward(x, weights, biases, *, block_batch=None):
    """SIMLP forward: (Linear -> ReLU) * (L-1) -> Linear -> softmax.

    x:       (B, in_dim) float array
    weights: list of (fan_in, fan_out) arrays (transposed vs. torch Linear)
    biases:  list of (fan_out,) arrays
    Returns (B, out_dim) float32 softmax probabilities.
    """
    B, in_dim = x.shape
    nb_layers = len(weights)
    hid_dim = weights[0].shape[1]
    out_dim = weights[-1].shape[1]

    # bf16 operands for HBM streaming + bf16 MXU; biases stay f32 and are
    # reshaped to (1, fan_out) for clean lane-wise broadcast in VMEM.
    x_bf = x.astype(jnp.bfloat16)
    weights_bf = [w.astype(jnp.bfloat16) for w in weights]
    biases_2d = [b.reshape(1, -1).astype(jnp.float32) for b in biases]

    weights_bytes = sum(2 * w.size * 2 for w in weights_bf) + \
                    sum(2 * b.size * 4 for b in biases_2d)

    if block_batch is None:
        block_batch = _choose_block_batch(B, in_dim, hid_dim, out_dim,
                                          weights_bytes)
    block_batch = max(16, _round_up(block_batch, 16))

    # Pad ragged batches up to a multiple of the tile; padded rows (zeros) are
    # dropped after the call (their softmax is computed and discarded).
    B_pad = _round_up(B, block_batch)
    if B_pad != B:
        x_bf = jnp.pad(x_bf, ((0, B_pad - B), (0, 0)))

    # Interleave (w, b) pairs as kernel operands.
    param_args = []
    for w, b in zip(weights_bf, biases_2d):
        param_args += [w, b]

    in_specs = [pl.BlockSpec((block_batch, in_dim), lambda i: (i, 0))]
    for w, b in zip(weights_bf, biases_2d):
        # Grid-invariant operands: constant index_map keeps them VMEM-resident.
        # For very large hid_dim, add pipeline_mode=pl.Buffered(1) here to stop
        # double-buffering the resident weights (matters on v7x's 64 MiB VMEM).
        in_specs.append(pl.BlockSpec(w.shape, lambda i: (0, 0)))
        in_specs.append(pl.BlockSpec(b.shape, lambda i: (0, 0)))

    out_spec = pl.BlockSpec((block_batch, out_dim), lambda i: (i, 0))

    kernel = _make_simlp_kernel(nb_layers)

    out = pl.pallas_call(
        kernel,
        out_shape=jax.ShapeDtypeStruct((B_pad, out_dim), jnp.float32),
        grid_spec=pltpu.PrefetchScalarGridSpec(
            num_scalar_prefetch=0,
            grid=(B_pad // block_batch,),
            in_specs=in_specs,
            out_specs=out_spec,
        ),
        compiler_params=pltpu.CompilerParams(
            dimension_semantics=("parallel",),
            vmem_limit_bytes=_VMEM_LIMIT_BYTES,
        ),
    )(x_bf, *param_args)

    return out[:B] if B_pad != B else out


def init_simlp_params(key, in_dim, hid_dim, out_dim, nb_layers):
    """Deterministic init mirroring nn.Linear shapes (weights stored transposed)."""
    dims = [in_dim] + [hid_dim] * (nb_layers - 1) + [out_dim]
    weights, biases = [], []
    for layer in range(nb_layers):
        fan_in, fan_out = dims[layer], dims[layer + 1]
        key, wk, bk = jax.random.split(key, 3)
        bound = 1.0 / jnp.sqrt(fan_in)
        # torch.nn.Linear stores weight as (out, in); we store (in, out) so the
        # kernel computes x @ W + b directly on the MXU.
        w = jax.random.uniform(wk, (fan_in, fan_out), jnp.float32, -bound, bound)
        b = jax.random.uniform(bk, (fan_out,), jnp.float32, -bound, bound)
        weights.append(w)
        biases.append(b)
    return weights, biases


# TODO(synk): get_gradients() exposes parameter .grad from the torch autograd
# backward pass; only the forward is implemented as a Pallas kernel here.


if __name__ == "__main__":
    # Small shapes consistent with the module's forward:
    # SIMLP(in_dim=32, hid_dim=32, out_dim=16, nb_layers=3), batch=16.
    batch, in_dim, hid_dim, out_dim, nb_layers = 16, 32, 32, 16, 3

    key = jax.random.PRNGKey(0)
    key, xk = jax.random.split(key)
    x = jax.random.normal(xk, (batch, in_dim), jnp.float32)

    weights, biases = init_simlp_params(key, in_dim, hid_dim, out_dim, nb_layers)

    out = simlp_forward(x, weights, biases)
    out = jax.block_until_ready(out)

    # Pure-JAX f32 reference (kernel uses bf16 operands -> looser tolerance).
    h = x
    for l in range(nb_layers):
        h = h @ weights[l] + biases[l]
        if l < nb_layers - 1:
            h = jnp.maximum(h, 0.0)
    ref = jax.nn.softmax(h, axis=-1)

    assert out.shape == (batch, out_dim)
    assert jnp.allclose(jnp.sum(out, axis=-1), 1.0, atol=2e-2)
    assert jnp.allclose(out, ref, atol=3e-2), float(jnp.max(jnp.abs(out - ref)))

    print("KERNEL_OK")
</pallas_src>

<mosaic_0001>
module attributes {stable_mosaic.version = 11 : i64} {
  func.func @kernel(%arg0: i32, %arg1: memref<16x32xbf16, #tpu.memory_space<vmem>>, %arg2: memref<32x32xbf16, #tpu.memory_space<vmem>>, %arg3: memref<1x32xf32, #tpu.memory_space<vmem>>, %arg4: memref<32x32xbf16, #tpu.memory_space<vmem>>, %arg5: memref<1x32xf32, #tpu.memory_space<vmem>>, %arg6: memref<32x16xbf16, #tpu.memory_space<vmem>>, %arg7: memref<1x16xf32, #tpu.memory_space<vmem>>, %arg8: memref<16x16xf32, #tpu.memory_space<vmem>>) attributes {dimension_semantics = [#tpu.dimension_semantics<parallel>], iteration_bounds = array<i64: 1>, scalar_prefetch = 0 : i64, scratch_operands = 0 : i64, tpu.core_type = #tpu.core_type<tc>, window_params = [{transform_indices = @transform_0, window_bounds = array<i64: 16, 32>}, {pipeline_mode = #tpu.pipeline_mode<synchronous>, transform_indices = @transform_1, window_bounds = array<i64: 32, 32>}, {pipeline_mode = #tpu.pipeline_mode<synchronous>, transform_indices = @transform_2, window_bounds = array<i64: 1, 32>}, {pipeline_mode = #tpu.pipeline_mode<synchronous>, transform_indices = @transform_3, window_bounds = array<i64: 32, 32>}, {pipeline_mode = #tpu.pipeline_mode<synchronous>, transform_indices = @transform_4, window_bounds = array<i64: 1, 32>}, {pipeline_mode = #tpu.pipeline_mode<synchronous>, transform_indices = @transform_5, window_bounds = array<i64: 32, 16>}, {pipeline_mode = #tpu.pipeline_mode<synchronous>, transform_indices = @transform_6, window_bounds = array<i64: 1, 16>}, {transform_indices = @transform_7, window_bounds = array<i64: 16, 16>}]} {
    %c0 = arith.constant 0 : index
    %c0_0 = arith.constant 0 : index
    %0 = vector.load %arg1[%c0, %c0_0] : memref<16x32xbf16, #tpu.memory_space<vmem>>, vector<16x32xbf16>
    %c0_1 = arith.constant 0 : index
    %c0_2 = arith.constant 0 : index
    %1 = vector.load %arg2[%c0_1, %c0_2] : memref<32x32xbf16, #tpu.memory_space<vmem>>, vector<32x32xbf16>
    %c0_3 = arith.constant 0 : index
    %c0_4 = arith.constant 0 : index
    %2 = vector.load %arg3[%c0_3, %c0_4] : memref<1x32xf32, #tpu.memory_space<vmem>>, vector<1x32xf32>
    %cst = arith.constant dense<0.000000e+00> : vector<16x32xf32>
    %3 = tpu.matmul %0, %1, %cst {dimension_numbers = #tpu.dot_dimension_numbers<[1], [0], [0], [1], [0, 0, 1, 1], [], []>} : vector<16x32xbf16>, vector<32x32xbf16>, vector<16x32xf32> -> vector<16x32xf32>
    %4 = vector.broadcast %2 : vector<1x32xf32> to vector<16x32xf32>
    %5 = arith.addf %3, %4 : vector<16x32xf32>
    %cst_5 = arith.constant 0.000000e+00 : f32
    %6 = vector.broadcast %cst_5 : f32 to vector<16x32xf32>
    %7 = arith.maximumf %5, %6 : vector<16x32xf32>
    %8 = arith.truncf %7 : vector<16x32xf32> to vector<16x32xbf16>
    %c0_6 = arith.constant 0 : index
    %c0_7 = arith.constant 0 : index
    %9 = vector.load %arg4[%c0_6, %c0_7] : memref<32x32xbf16, #tpu.memory_space<vmem>>, vector<32x32xbf16>
    %c0_8 = arith.constant 0 : index
    %c0_9 = arith.constant 0 : index
    %10 = vector.load %arg5[%c0_8, %c0_9] : memref<1x32xf32, #tpu.memory_space<vmem>>, vector<1x32xf32>
    %cst_10 = arith.constant dense<0.000000e+00> : vector<16x32xf32>
    %11 = tpu.matmul %8, %9, %cst_10 {dimension_numbers = #tpu.dot_dimension_numbers<[1], [0], [0], [1], [0, 0, 1, 1], [], []>} : vector<16x32xbf16>, vector<32x32xbf16>, vector<16x32xf32> -> vector<16x32xf32>
    %12 = vector.broadcast %10 : vector<1x32xf32> to vector<16x32xf32>
    %13 = arith.addf %11, %12 : vector<16x32xf32>
    %cst_11 = arith.constant 0.000000e+00 : f32
    %14 = vector.broadcast %cst_11 : f32 to vector<16x32xf32>
    %15 = arith.maximumf %13, %14 : vector<16x32xf32>
    %16 = arith.truncf %15 : vector<16x32xf32> to vector<16x32xbf16>
    %c0_12 = arith.constant 0 : index
    %c0_13 = arith.constant 0 : index
    %17 = vector.load %arg6[%c0_12, %c0_13] : memref<32x16xbf16, #tpu.memory_space<vmem>>, vector<32x16xbf16>
    %c0_14 = arith.constant 0 : index
    %c0_15 = arith.constant 0 : index
    %18 = vector.load %arg7[%c0_14, %c0_15] : memref<1x16xf32, #tpu.memory_space<vmem>>, vector<1x16xf32>
    %cst_16 = arith.constant dense<0.000000e+00> : vector<16x16xf32>
    %19 = tpu.matmul %16, %17, %cst_16 {dimension_numbers = #tpu.dot_dimension_numbers<[1], [0], [0], [1], [0, 0, 1, 1], [], []>} : vector<16x32xbf16>, vector<32x16xbf16>, vector<16x16xf32> -> vector<16x16xf32>
    %20 = vector.broadcast %18 : vector<1x16xf32> to vector<16x16xf32>
    %21 = arith.addf %19, %20 : vector<16x16xf32>
    %cst_17 = arith.constant dense<0xFF800000> : vector<16xf32>
    %22 = vector.multi_reduction <maximumf>, %21, %cst_17 [1] : vector<16x16xf32> to vector<16xf32>
    %23 = vector.shape_cast %22 : vector<16xf32> to vector<16x1xf32>
    %24 = vector.broadcast %23 : vector<16x1xf32> to vector<16x16xf32>
    %25 = arith.subf %21, %24 : vector<16x16xf32>
    %26 = math.exp %25 : vector<16x16xf32>
    %cst_18 = arith.constant dense<0.000000e+00> : vector<16xf32>
    %27 = vector.multi_reduction <add>, %26, %cst_18 [1] : vector<16x16xf32> to vector<16xf32>
    %28 = vector.shape_cast %27 : vector<16xf32> to vector<16x1xf32>
    %29 = tpu.reciprocal %28 {approx = true} : vector<16x1xf32> -> vector<16x1xf32>
    %30 = vector.broadcast %29 : vector<16x1xf32> to vector<16x16xf32>
    %31 = arith.mulf %26, %30 : vector<16x16xf32>
    %c0_19 = arith.constant 0 : index
    %c0_20 = arith.constant 0 : index
    %32 = vector.load %arg8[%c0_19, %c0_20] : memref<16x16xf32, #tpu.memory_space<vmem>>, vector<16x16xf32>
    tpu.vector_store %arg8[%c0_19, %c0_20], %31 {strides = array<i32>} : memref<16x16xf32, #tpu.memory_space<vmem>>, vector<16x16xf32>,
    return
  }
  func.func @transform_0(%arg0: i32) -> (i32, i32) {
    %c0_i32 = arith.constant 0 : i32
    %c0_i32_0 = arith.constant 0 : i32
    return %arg0, %c0_i32 : i32, i32
  }
  func.func @transform_1(%arg0: i32) -> (i32, i32) {
    %c0_i32 = arith.constant 0 : i32
    %c0_i32_0 = arith.constant 0 : i32
    %c0_i32_1 = arith.constant 0 : i32
    return %c0_i32, %c0_i32_0 : i32, i32
  }
  func.func @transform_2(%arg0: i32) -> (i32, i32) {
    %c0_i32 = arith.constant 0 : i32
    %c0_i32_0 = arith.constant 0 : i32
    %c0_i32_1 = arith.constant 0 : i32
    return %c0_i32, %c0_i32_0 : i32, i32
  }
  func.func @transform_3(%arg0: i32) -> (i32, i32) {
    %c0_i32 = arith.constant 0 : i32
    %c0_i32_0 = arith.constant 0 : i32
    %c0_i32_1 = arith.constant 0 : i32
    return %c0_i32, %c0_i32_0 : i32, i32
  }
  func.func @transform_4(%arg0: i32) -> (i32, i32) {
    %c0_i32 = arith.constant 0 : i32
    %c0_i32_0 = arith.constant 0 : i32
    %c0_i32_1 = arith.constant 0 : i32
    return %c0_i32, %c0_i32_0 : i32, i32
  }
  func.func @transform_5(%arg0: i32) -> (i32, i32) {
    %c0_i32 = arith.constant 0 : i32
    %c0_i32_0 = arith.constant 0 : i32
    %c0_i32_1 = arith.constant 0 : i32
    return %c0_i32, %c0_i32_0 : i32, i32
  }
  func.func @transform_6(%arg0: i32) -> (i32, i32) {
    %c0_i32 = arith.constant 0 : i32
    %c0_i32_0 = arith.constant 0 : i32
    %c0_i32_1 = arith.constant 0 : i32
    return %c0_i32, %c0_i32_0 : i32, i32
  }
  func.func @transform_7(%arg0: i32) -> (i32, i32) {
    %c0_i32 = arith.constant 0 : i32
    %c0_i32_0 = arith.constant 0 : i32
    return %arg0, %c0_i32 : i32, i32
  }
}

</mosaic_0001>

<llo_original>
// kernel: tpu_custom_call.1
$region0: #{tpu_custom_call.1}
  #allocation0 [shape = 'u32[]', space=smem, size = 0x4, offset = 0x4, fixed_abs, tag = 'smem constant byte address 0x4 - core index']
  #allocation1 [shape = 'u32[144,128]{1,0:T(1,128)}', space=vmem, size = 0x12000, scoped, tag = 'internal scratch']
  %s0 = inlined_call_operand.hbm [shape: bf16[16,32], index: 0, kind: input, shape index: {}]
  %s1 = inlined_call_operand.vmem [shape: bf16[32,32], index: 1, kind: input, shape index: {}]
  %s2 = inlined_call_operand.vmem [shape: f32[1,32], index: 2, kind: input, shape index: {}]
  %s3 = inlined_call_operand.vmem [shape: bf16[32,32], index: 3, kind: input, shape index: {}]
  %s4 = inlined_call_operand.vmem [shape: f32[1,32], index: 4, kind: input, shape index: {}]
  %s5 = inlined_call_operand.vmem [shape: bf16[32,16], index: 5, kind: input, shape index: {}]
  %s6 = inlined_call_operand.vmem [shape: f32[1,16], index: 6, kind: input, shape index: {}]
  %s7 = inlined_call_operand.hbm [shape: f32[16,16], index: 7, kind: output, shape index: {}]
  %s8 = sld [smem:[#allocation0]]
  $region42: #{tpu_custom_call.1} parent=0
    _
  %s10 = ssub.s32 1, %s8
  %s11 = scalar_select 0, %s10, %s8
  $region1: #{tpu_custom_call.1} parent=0
    #allocation2 [shape = 'u8[4096]{0}', space=vmem, size = 0x1000, scoped, tag = 'input window, operand 0, single buffered']
    #allocation3 [shape = 's32[1]{0}', space=sflag, size = 0x4, scoped, tag = 'scoped memory for tpu_custom_call.1']
    #allocation4 [shape = 's32[1]{0}', space=sflag, size = 0x4, scoped, tag = 'scoped memory for tpu_custom_call.1']
    #allocation5 [shape = 'u8[8192]{0}', space=vmem, size = 0x2000, scoped, tag = 'output window, operand 0, single buffered']
    %12 = vsyncpa [#allocation3], 0
    %13 = vsyncpa [#allocation4], 0
    // Predicated region
    $region2: #{tpu_custom_call.1} parent=1 // pred_check
      _
    $region3: #{tpu_custom_call.1} parent=1 // pred_check_branch
      %15 = sbr.rel (0) target = $region5
    $region4: #{tpu_custom_call.1} parent=1 // pred_region
      %s17 = ssub.s32 128, 128
      %18 = vsyncadd [#allocation3], %s17
      %s19 = sshll.u32 [#allocation2], 4
      %s20 = int_to_ptr.vmem [resolvable:$true] %s19
      %25 = dma.hbm_to_vmem [thread:$0]  %s0, 128, %s20, [#allocation3], 64, 64, 4
    $region5: #{tpu_custom_call.1} parent=1 // pred_fallthru
      _
    // Predicated region
    $region6: #{tpu_custom_call.1} parent=1 // pred_check
      _
    $region7: #{tpu_custom_call.1} parent=1 // pred_check_branch
      %27 = sbr.rel (0) target = $region9
    $region8: #{tpu_custom_call.1} parent=1 // pred_region
      _
    $region9: #{tpu_custom_call.1} parent=1 // pred_fallthru
      _
    // Predicated region
    $region10: #{tpu_custom_call.1} parent=1 // pred_check
      _
    $region11: #{tpu_custom_call.1} parent=1 // pred_check_branch
      %29 = sbr.rel (0) target = $region13
    $region12: #{tpu_custom_call.1} parent=1 // pred_region
      _
    $region13: #{tpu_custom_call.1} parent=1 // pred_fallthru
      _
    // Predicated region
    $region14: #{tpu_custom_call.1} parent=1 // pred_check
      _
    $region15: #{tpu_custom_call.1} parent=1 // pred_check_branch
      %31 = sbr.rel (0) target = $region17
    $region16: #{tpu_custom_call.1} parent=1 // pred_region
      _
    $region17: #{tpu_custom_call.1} parent=1 // pred_fallthru
      _
    // Predicated region
    $region18: #{tpu_custom_call.1} parent=1 // pred_check
      _
    $region19: #{tpu_custom_call.1} parent=1 // pred_check_branch
      %33 = sbr.rel (0) target = $region21
    $region20: #{tpu_custom_call.1} parent=1 // pred_region
      _
    $region21: #{tpu_custom_call.1} parent=1 // pred_fallthru
      _
    // Predicated region
    $region22: #{tpu_custom_call.1} parent=1 // pred_check
      _
    $region23: #{tpu_custom_call.1} parent=1 // pred_check_branch
      %35 = sbr.rel (0) target = $region25
    $region24: #{tpu_custom_call.1} parent=1 // pred_region
      _
    $region25: #{tpu_custom_call.1} parent=1 // pred_fallthru
      _
    // Predicated region
    $region26: #{tpu_custom_call.1} parent=1 // pred_check
      _
    $region27: #{tpu_custom_call.1} parent=1 // pred_check_branch
      %37 = sbr.rel (0) target = $region29
    $region28: #{tpu_custom_call.1} parent=1 // pred_region
      _
    $region29: #{tpu_custom_call.1} parent=1 // pred_fallthru
      _
    // Predicated region
    $region30: #{tpu_custom_call.1} parent=1 // pred_check
      _
    $region31: #{tpu_custom_call.1} parent=1 // pred_check_branch
      %39 = sbr.rel (0) target = $region33
    $region32: #{tpu_custom_call.1} parent=1 // pred_region
      %40 = dma.done [#allocation3], 128
    $region33: #{tpu_custom_call.1} parent=1 // pred_fallthru
      _
    %v42 = vld [vmem:[#allocation2] sm:$0xf]
    %v43 = vld [vmem:[#allocation2 + $0x4] sm:$0xf]
    %v44 = vld [vmem:[%s1] sm:$0xf]
    %v45 = vld [vmem:[%s1 + $0x4] sm:$0xf]
    %v46 = vld [vmem:[%s1 + $0x8] sm:$0xf]
    %v47 = vld [vmem:[%s1 + $0xc] sm:$0xf]
    %v48 = vld [vmem:[%s2] sm:$0x1]
    %v50 = vlaneseq
    %v51 = vshrl.u32 %v50, 7
    %v52 = vsub.s32 0, %v51
    %v53 = vrot.slane %v48, %v52
    %v57 = vunpack.c.l.b16 %v42
    %v58 = vunpack.c.l.b16 %v43
    %v59 = vpack.c.b16 %v58, %v57
    %v64 = vunpack.c.l.b16 %v44
    %v65 = vunpack.c.l.b16 %v45
    %v66 = vunpack.c.l.b16 %v46
    %v67 = vunpack.c.l.b16 %v47
    %v68 = vpack.c.b16 %v65, %v64
    %v69 = vpack.c.b16 %v67, %v66
    %vm72 = vcmask 261120
    %v74 = vsel %vm72, %v59, 0
    %76 = vmatprep.subr.bf16.mxu0 0
    %77 = vmatpush1.bf16.msra.mxu0 %v68
    %78 = vmatprep.subr.bf16.mxu0 0
    %79 = vmatpush1.bf16.msra.mxu0 %v69
    %80 = vmatprep.subr.bf16.mxu0 0
    %81 = vmatpush1.bf16.msra.mxu0 0
    %82 = vmatprep.subr.bf16.mxu0 0
    %83 = vmatpush1.bf16.msra.mxu0 0
    %84 = vmatprep.subr.bf16.mxu0 0
    %85 = vmatpush1.bf16.msra.mxu0 0
    %86 = vmatprep.subr.bf16.mxu0 0
    %87 = vmatpush1.bf16.msra.mxu0 0
    %88 = vmatprep.subr.bf16.mxu0 0
    %89 = vmatpush1.bf16.msra.mxu0 0
    %90 = vmatprep.subr.bf16.mxu0 0
    %91 = vmatpush1.bf16.msra.mxu0 0
    %92 = vmatprep.subr.bf16.mxu0 0
    %93 = vmatpush1.bf16.msra.mxu0 0
    %94 = vmatprep.subr.bf16.mxu0 0
    %95 = vmatpush1.bf16.msra.mxu0 0
    %96 = vmatprep.subr.bf16.mxu0 0
    %97 = vmatpush1.bf16.msra.mxu0 0
    %98 = vmatprep.subr.bf16.mxu0 0
    %99 = vmatpush1.bf16.msra.mxu0 0
    %100 = vmatprep.subr.bf16.mxu0 0
    %101 = vmatpush1.bf16.msra.mxu0 0
    %102 = vmatprep.subr.bf16.mxu0 0
    %103 = vmatpush1.bf16.msra.mxu0 0
    %104 = vmatprep.subr.bf16.mxu0 0
    %105 = vmatpush1.bf16.msra.mxu0 0
    %106 = vmatprep.subr.bf16.mxu0 0
    %107 = vmatpush1.bf16.msra.mxu0 0
    %108 = vmatprep.mubr.bf16.mxu0 0
    %109 = vmatmul.mubr.bf16.gmra.mrb[0].mxu0 %v74
    %v110 = vpop.f32.mrb[0].mxu0
    %v111 = vadd.f32 %v53, %v110
    %v112 = vpop.f32.mrb[0].mxu0
    %v113 = vpop.f32.mrb[0].mxu0
    %v114 = vadd.f32 %v53, %v113
    %v115 = vpop.f32.mrb[0].mxu0
    %116 = vdwg.mxu0
    %v117 = vmax.f32 %v111, 0.0
    %v118 = vmax.f32 %v114, 0.0
    %v119 = vpack.c.bf16 %v118, %v117
    %v120 = vld [vmem:[%s3] sm:$0xf]
    %v121 = vld [vmem:[%s3 + $0x4] sm:$0xf]
    %v122 = vld [vmem:[%s3 + $0x8] sm:$0xf]
    %v123 = vld [vmem:[%s3 + $0xc] sm:$0xf]
    %v124 = vld [vmem:[%s4] sm:$0x1]
    %v126 = vlaneseq
    %v127 = vshrl.u32 %v126, 7
    %v128 = vsub.s32 0, %v127
    %v129 = vrot.slane %v124, %v128
    %v135 = vunpack.c.l.b16 %v120
    %v136 = vunpack.c.l.b16 %v121
    %v137 = vunpack.c.l.b16 %v122
    %v138 = vunpack.c.l.b16 %v123
    %v139 = vpack.c.b16 %v136, %v135
    %v140 = vpack.c.b16 %v138, %v137
    %v144 = vsel %vm72, %v119, 0
    %146 = vmatprep.subr.bf16.mxu0 0
    %147 = vmatpush1.bf16.msra.mxu0 %v139
    %148 = vmatprep.subr.bf16.mxu0 0
    %149 = vmatpush1.bf16.msra.mxu0 %v140
    %150 = vmatprep.subr.bf16.mxu0 0
    %151 = vmatpush1.bf16.msra.mxu0 0
    %152 = vmatprep.subr.bf16.mxu0 0
    %153 = vmatpush1.bf16.msra.mxu0 0
    %154 = vmatprep.subr.bf16.mxu0 0
    %155 = vmatpush1.bf16.msra.mxu0 0
    %156 = vmatprep.subr.bf16.mxu0 0
    %157 = vmatpush1.bf16.msra.mxu0 0
    %158 = vmatprep.subr.bf16.mxu0 0
    %159 = vmatpush1.bf16.msra.mxu0 0
    %160 = vmatprep.subr.bf16.mxu0 0
    %161 = vmatpush1.bf16.msra.mxu0 0
    %162 = vmatprep.subr.bf16.mxu0 0
    %163 = vmatpush1.bf16.msra.mxu0 0
    %164 = vmatprep.subr.bf16.mxu0 0
    %165 = vmatpush1.bf16.msra.mxu0 0
    %166 = vmatprep.subr.bf16.mxu0 0
    %167 = vmatpush1.bf16.msra.mxu0 0
    %168 = vmatprep.subr.bf16.mxu0 0
    %169 = vmatpush1.bf16.msra.mxu0 0
    %170 = vmatprep.subr.bf16.mxu0 0
    %171 = vmatpush1.bf16.msra.mxu0 0
    %172 = vmatprep.subr.bf16.mxu0 0
    %173 = vmatpush1.bf16.msra.mxu0 0
    %174 = vmatprep.subr.bf16.mxu0 0
    %175 = vmatpush1.bf16.msra.mxu0 0
    %176 = vmatprep.subr.bf16.mxu0 0
    %177 = vmatpush1.bf16.msra.mxu0 0
    %178 = vmatprep.mubr.bf16.mxu0 0
    %179 = vmatmul.mubr.bf16.gmra.mrb[0].mxu0 %v144
    %v180 = vpop.f32.mrb[0].mxu0
    %v181 = vadd.f32 %v129, %v180
    %v182 = vpop.f32.mrb[0].mxu0
    %v183 = vpop.f32.mrb[0].mxu0
    %v184 = vadd.f32 %v129, %v183
    %v185 = vpop.f32.mrb[0].mxu0
    %186 = vdwg.mxu0
    %v187 = vmax.f32 %v181, 0.0
    %v188 = vmax.f32 %v184, 0.0
    %v189 = vpack.c.bf16 %v188, %v187
    %v190 = vld [vmem:[%s5] sm:$0xf]
    %v191 = vld [vmem:[%s5 + $0x4] sm:$0xf]
    %v192 = vld [vmem:[%s5 + $0x8] sm:$0xf]
    %v193 = vld [vmem:[%s5 + $0xc] sm:$0xf]
    %v194 = vld [vmem:[%s6] sm:$0x1]
    %v196 = vlaneseq
    %v197 = vshrl.u32 %v196, 7
    %v198 = vsub.s32 0, %v197
    %v199 = vrot.slane %v194, %v198
    %v205 = vunpack.c.l.b16 %v190
    %v206 = vunpack.c.l.b16 %v191
    %v207 = vunpack.c.l.b16 %v192
    %v208 = vunpack.c.l.b16 %v193
    %v209 = vpack.c.b16 %v206, %v205
    %v210 = vpack.c.b16 %v208, %v207
    %v214 = vsel %vm72, %v189, 0
    %216 = vmatprep.subr.bf16.mxu0 0
    %217 = vmatpush1.bf16.msra.mxu0 %v209
    %218 = vmatprep.subr.bf16.mxu0 0
    %219 = vmatpush1.bf16.msra.mxu0 %v210
    %220 = vmatprep.subr.bf16.mxu0 0
    %221 = vmatpush1.bf16.msra.mxu0 0
    %222 = vmatprep.subr.bf16.mxu0 0
    %223 = vmatpush1.bf16.msra.mxu0 0
    %224 = vmatprep.subr.bf16.mxu0 0
    %225 = vmatpush1.bf16.msra.mxu0 0
    %226 = vmatprep.subr.bf16.mxu0 0
    %227 = vmatpush1.bf16.msra.mxu0 0
    %228 = vmatprep.subr.bf16.mxu0 0
    %229 = vmatpush1.bf16.msra.mxu0 0
    %230 = vmatprep.subr.bf16.mxu0 0
    %231 = vmatpush1.bf16.msra.mxu0 0
    %232 = vmatprep.subr.bf16.mxu0 0
    %233 = vmatpush1.bf16.msra.mxu0 0
    %234 = vmatprep.subr.bf16.mxu0 0
    %235 = vmatpush1.bf16.msra.mxu0 0
    %236 = vmatprep.subr.bf16.mxu0 0
    %237 = vmatpush1.bf16.msra.mxu0 0
    %238 = vmatprep.subr.bf16.mxu0 0
    %239 = vmatpush1.bf16.msra.mxu0 0
    %240 = vmatprep.subr.bf16.mxu0 0
    %241 = vmatpush1.bf16.msra.mxu0 0
    %242 = vmatprep.subr.bf16.mxu0 0
    %243 = vmatpush1.bf16.msra.mxu0 0
    %244 = vmatprep.subr.bf16.mxu0 0
    %245 = vmatpush1.bf16.msra.mxu0 0
    %246 = vmatprep.subr.bf16.mxu0 0
    %247 = vmatpush1.bf16.msra.mxu0 0
    %248 = vmatprep.mubr.bf16.mxu0 0
    %249 = vmatmul.mubr.bf16.gmra.mrb[0].mxu0 %v214
    %v250 = vpop.f32.mrb[0].mxu0
    %v251 = vadd.f32 %v199, %v250
    %v252 = vpop.f32.mrb[0].mxu0
    %v253 = vpop.f32.mrb[0].mxu0
    %v254 = vadd.f32 %v199, %v253
    %v255 = vpop.f32.mrb[0].mxu0
    %256 = vdwg.mxu0
    %vm257 = vcmask 130048
    %v258 = vsel %vm257, %v251, -inf
    %259 = vmax.xlane.f32.xlu0 %v258
    %v260 = vpop.xlane.xlu0 %259
    %v261 = vsel %vm257, %v254, -inf
    %262 = vmax.xlane.f32.xlu0 %v261
    %v263 = vpop.xlane.xlu0 %262
    %v264 = vsub.f32 %v251, %v260
    %v265 = vsub.f32 %v254, %v263
    %v266 = vmul.f32 %v264, 1.442695
    %v267 = vpow.pop %v266
    %v268 = vmul.f32 %v265, 1.442695
    %v269 = vpow.pop %v268
    %v270 = vsel %vm257, %v267, 0.0
    %271 = vadd.xlane.f32.xlu0 %v270
    %v272 = vpop.xlane.xlu0 %271
    %v273 = vsel %vm257, %v269, 0.0
    %274 = vadd.xlane.f32.xlu0 %v273
    %v275 = vpop.xlane.xlu0 %274
    %v276 = vrcp.pop %v272
    %v277 = vrcp.pop %v275
    %v278 = vmul.f32 %v267, %v276
    %v279 = vmul.f32 %v269, %v277
    %280 = vst.msk [vmem:[#allocation5] sm:$0xff] %vm257, %v278
    %281 = vst.msk [vmem:[#allocation5 + $0x8] sm:$0xff] %vm257, %v279
    // Predicated region
    $region34: #{tpu_custom_call.1} parent=1 // pred_check
      _
    $region35: #{tpu_custom_call.1} parent=1 // pred_check_branch
      %283 = sbr.rel (0) target = $region37
    $region36: #{tpu_custom_call.1} parent=1 // pred_region
      %s285 = ssub.s32 256, 256
      %286 = vsyncadd [#allocation4], %s285
      %s287 = sshll.u32 [#allocation5], 4
      %s288 = int_to_ptr.vmem [resolvable:$true] %s287
      %293 = dma.vmem_to_hbm [thread:$0]  %s288, 256, %s7, [#allocation4], 128, 128, 8
    $region37: #{tpu_custom_call.1} parent=1 // pred_fallthru
      _
    // Predicated region
    $region38: #{tpu_custom_call.1} parent=1 // pred_check
      _
    $region39: #{tpu_custom_call.1} parent=1 // pred_check_branch
      %295 = sbr.rel (0) target = $region41
    $region40: #{tpu_custom_call.1} parent=1 // pred_region
      %296 = dma.done [#allocation4], 256
    $region41: #{tpu_custom_call.1} parent=1 // pred_fallthru
      _
    %297 = vsyncpa [#allocation3], 1
    %298 = vsyncpa [#allocation4], 1

</llo_original>
